<compile_context>
chip_gen: v7x
topology: tpu7x:2x2x1
jax: 0.10.0
libtpu: 0.0.40
codegen_flags: <defaults>
</compile_context>

<pallas_src>
import jax
import jax.numpy as jnp
from jax.experimental import pallas as pl
from jax.experimental.pallas import tpu as pltpu


def autoencoder_kernel(x_ref, w1_ref, b1_ref, w2_ref, b2_ref, o_ref):
    # encoder: Linear(D -> 8) + ReLU.  MXU accumulates in f32; bf16 inputs are
    # consumed natively (bf16 -> f32 is lossless, identical to an f32 upcast).
    h = jnp.dot(x_ref[...], w1_ref[...], preferred_element_type=jnp.float32)
    h = jnp.maximum(h + b1_ref[...].astype(jnp.float32), 0.0)          # (TB, 8)
    # decoder: Linear(8 -> D) + Sigmoid
    y = jnp.dot(h, w2_ref[...].astype(jnp.float32),
                preferred_element_type=jnp.float32)
    y = y + b2_ref[...].astype(jnp.float32)                            # (TB, D)
    # sigmoid(y) == 0.5 * (tanh(y/2) + 1): a single EUP transcendental/element.
    o_ref[...] = (0.5 * (jnp.tanh(0.5 * y) + 1.0)).astype(o_ref.dtype)


def _round_up(x, m):
    return ((x + m - 1) // m) * m


def _round_down(x, m):
    return (x // m) * m


def autoencoder_forward(x, w1, b1, w2, b2, *, tb=None):
    """x: (B, D).  w1: (D, H), b1: (1, H), w2: (H, D), b2: (1, D).

    Output dtype == x dtype.  Pass bf16 x / params for the halved-HBM-traffic
    boundary; compute is f32 inside the kernel either way.
    """
    B, D = x.shape
    H = w1.shape[1]
    io_dtype = x.dtype
    itemsize = jnp.dtype(io_dtype).itemsize
    sublane = 16 if itemsize == 2 else 8          # bf16 min tile (16,128)

    # --- generation-aware VMEM budget ------------------------------------
    try:
        vmem_cap = int(pltpu.get_tpu_info().vmem_capacity_bytes)
    except Exception:
        vmem_cap = 64 * 1024 * 1024               # safe on every generation
    vmem_budget = int(vmem_cap * 0.4)             # pipeline working-set target
    vmem_limit = int(min(vmem_cap, vmem_budget + (4 << 20)))

    # --- VMEM bytes per batch row -----------------------------------------
    #   x tile (2 buffers) + out tile (2 buffers) in io dtype
    #   + f32 intermediates (upcast x, decoder y) + cast-temp margin
    weight_bytes = (2 * D * H + H + D) * itemsize
    per_row = D * (6 * itemsize + 8)
    tb_cap = max(sublane,
                 _round_down(max(0, vmem_budget - weight_bytes) // per_row,
                             sublane))

    # --- pick the batch tile ----------------------------------------------
    if tb is None:
        # target ~4 MiB of x per grid step; cap at 8192 rows
        tb = min(8192, max(sublane, (4 << 20) // (D * itemsize)))
    tb = max(sublane, _round_down(min(tb, tb_cap), sublane))

    # Keep block_shape[0] <= batch (rounded down to a sublane multiple); only
    # the degenerate B < sublane case gets a tiny one-off pad.  Ragged last
    # blocks are handled by Pallas' partial-block masking -> no jnp.pad /
    # output-slice extra HBM passes for normal batch sizes.
    pad_b = B
    if B < sublane:
        pad_b = sublane
        x = jnp.pad(x, ((0, pad_b - B), (0, 0)))
        tb = sublane
    else:
        tb = min(tb, _round_down(B, sublane))

    num_tiles = pl.cdiv(pad_b, tb)

    flops = 2 * pad_b * D * H * 2                 # two matmuls
    transcendentals = pad_b * D                   # one tanh per output element
    bytes_accessed = (2 * pad_b * D + 2 * D * H + H + D) * itemsize

    out = pl.pallas_call(
        autoencoder_kernel,
        out_shape=jax.ShapeDtypeStruct((pad_b, D), io_dtype),
        grid=(num_tiles,),
        in_specs=[
            pl.BlockSpec((tb, D), lambda i: (i, 0)),          # x tile
            pl.BlockSpec(w1.shape, lambda i: (0, 0)),         # VMEM-resident
            pl.BlockSpec(b1.shape, lambda i: (0, 0)),
            pl.BlockSpec(w2.shape, lambda i: (0, 0)),
            pl.BlockSpec(b2.shape, lambda i: (0, 0)),
        ],
        out_specs=pl.BlockSpec((tb, D), lambda i: (i, 0)),
        compiler_params=pltpu.CompilerParams(
            # batch axis parallel -> megacore sharding on v7x.
            # TODO(synk): switch to pltpu.CORE_PARALLEL if profiling on v7x
            # shows only one TensorCore active.
            dimension_semantics=("parallel",),
            vmem_limit_bytes=vmem_limit),
        cost_estimate=pl.CostEstimate(
            flops=flops,
            transcendentals=transcendentals,
            bytes_accessed=bytes_accessed),
    )(x, w1, b1, w2, b2)

    return out[:B] if pad_b != B else out


def init_params(key, input_dim, hidden_dim=8, dtype=jnp.float32):
    """Deterministic PyTorch-style uniform(-1/sqrt(fan_in), 1/sqrt(fan_in)) init."""
    k1, k2, k3, k4 = jax.random.split(key, 4)
    bound1 = 1.0 / (input_dim ** 0.5)
    bound2 = 1.0 / (hidden_dim ** 0.5)
    # stored as (in_features, out_features)
    w1 = jax.random.uniform(k1, (input_dim, hidden_dim), dtype, -bound1, bound1)
    b1 = jax.random.uniform(k2, (1, hidden_dim), dtype, -bound1, bound1)
    w2 = jax.random.uniform(k3, (hidden_dim, input_dim), dtype, -bound2, bound2)
    b2 = jax.random.uniform(k4, (1, input_dim), dtype, -bound2, bound2)
    return w1, b1, w2, b2


if __name__ == "__main__":
    key = jax.random.PRNGKey(0)
    kx, kp = jax.random.split(key)

    batch = 200       # not a multiple of the tile -> exercises ragged blocks
    input_dim = 128   # lane-dense feature dim (multiple of 128)

    x = jax.random.normal(kx, (batch, input_dim), jnp.float32)
    w1, b1, w2, b2 = init_params(kp, input_dim, dtype=jnp.float32)

    # pure-JAX reference
    h_ref = jnp.maximum(x @ w1 + b1, 0.0)
    y_ref = jax.nn.sigmoid(h_ref @ w2 + b2)

    # 1) f32 boundary, small explicit tile -> multi-step grid with a ragged
    #    final block; strict numerical check.
    out_f32 = jax.block_until_ready(autoencoder_forward(x, w1, b1, w2, b2, tb=64))
    assert out_f32.shape == (batch, input_dim)
    assert out_f32.dtype == x.dtype
    assert jnp.allclose(out_f32, y_ref, atol=1e-5), "f32 mismatch vs reference"

    # 2) bf16 HBM boundary (halved traffic), auto-sized tile; f32 compute
    #    inside the kernel so only input/output rounding differs.
    x_bf = x.astype(jnp.bfloat16)
    params_bf = [p.astype(jnp.bfloat16) for p in (w1, b1, w2, b2)]
    out_bf = jax.block_until_ready(autoencoder_forward(x_bf, *params_bf))
    assert out_bf.shape == (batch, input_dim)
    assert out_bf.dtype == jnp.bfloat16
    assert jnp.allclose(out_bf.astype(jnp.float32), y_ref, atol=2e-2), \
        "bf16 mismatch vs reference"

    print("KERNEL_OK")
</pallas_src>

<mosaic_0001>
module attributes {stable_mosaic.version = 11 : i64} {
  func.func @autoencoder_kernel(%arg0: i32, %arg1: memref<64x128xf32, #tpu.memory_space<vmem>>, %arg2: memref<128x8xf32, #tpu.memory_space<vmem>>, %arg3: memref<1x8xf32, #tpu.memory_space<vmem>>, %arg4: memref<8x128xf32, #tpu.memory_space<vmem>>, %arg5: memref<1x128xf32, #tpu.memory_space<vmem>>, %arg6: memref<64x128xf32, #tpu.memory_space<vmem>>) attributes {dimension_semantics = [#tpu.dimension_semantics<parallel>], iteration_bounds = array<i64: 4>, scalar_prefetch = 0 : i64, scratch_operands = 0 : i64, tpu.core_type = #tpu.core_type<tc>, window_params = [{transform_indices = @transform_0, window_bounds = array<i64: 64, 128>}, {pipeline_mode = #tpu.pipeline_mode<synchronous>, transform_indices = @transform_1, window_bounds = array<i64: 128, 8>}, {pipeline_mode = #tpu.pipeline_mode<synchronous>, transform_indices = @transform_2, window_bounds = array<i64: 1, 8>}, {pipeline_mode = #tpu.pipeline_mode<synchronous>, transform_indices = @transform_3, window_bounds = array<i64: 8, 128>}, {pipeline_mode = #tpu.pipeline_mode<synchronous>, transform_indices = @transform_4, window_bounds = array<i64: 1, 128>}, {transform_indices = @transform_5, window_bounds = array<i64: 64, 128>}]} {
    %c0 = arith.constant 0 : index
    %c0_0 = arith.constant 0 : index
    %0 = vector.load %arg1[%c0, %c0_0] : memref<64x128xf32, #tpu.memory_space<vmem>>, vector<64x128xf32>
    %c0_1 = arith.constant 0 : index
    %c0_2 = arith.constant 0 : index
    %1 = vector.load %arg2[%c0_1, %c0_2] : memref<128x8xf32, #tpu.memory_space<vmem>>, vector<128x8xf32>
    %cst = arith.constant dense<0.000000e+00> : vector<64x8xf32>
    %2 = tpu.matmul %0, %1, %cst {dimension_numbers = #tpu.dot_dimension_numbers<[1], [0], [0], [1], [0, 0, 1, 1], [], []>} : vector<64x128xf32>, vector<128x8xf32>, vector<64x8xf32> -> vector<64x8xf32>
    %c0_3 = arith.constant 0 : index
    %c0_4 = arith.constant 0 : index
    %3 = vector.load %arg3[%c0_3, %c0_4] : memref<1x8xf32, #tpu.memory_space<vmem>>, vector<1x8xf32>
    %4 = vector.broadcast %3 : vector<1x8xf32> to vector<64x8xf32>
    %5 = arith.addf %2, %4 : vector<64x8xf32>
    %cst_5 = arith.constant 0.000000e+00 : f32
    %6 = vector.broadcast %cst_5 : f32 to vector<64x8xf32>
    %7 = arith.maximumf %5, %6 : vector<64x8xf32>
    %c0_6 = arith.constant 0 : index
    %c0_7 = arith.constant 0 : index
    %8 = vector.load %arg4[%c0_6, %c0_7] : memref<8x128xf32, #tpu.memory_space<vmem>>, vector<8x128xf32>
    %cst_8 = arith.constant dense<0.000000e+00> : vector<64x128xf32>
    %9 = tpu.matmul %7, %8, %cst_8 {dimension_numbers = #tpu.dot_dimension_numbers<[1], [0], [0], [1], [0, 0, 1, 1], [], []>} : vector<64x8xf32>, vector<8x128xf32>, vector<64x128xf32> -> vector<64x128xf32>
    %c0_9 = arith.constant 0 : index
    %c0_10 = arith.constant 0 : index
    %10 = vector.load %arg5[%c0_9, %c0_10] : memref<1x128xf32, #tpu.memory_space<vmem>>, vector<1x128xf32>
    %11 = vector.broadcast %10 : vector<1x128xf32> to vector<64x128xf32>
    %12 = arith.addf %9, %11 : vector<64x128xf32>
    %cst_11 = arith.constant 5.000000e-01 : f32
    %13 = vector.broadcast %cst_11 : f32 to vector<64x128xf32>
    %14 = arith.mulf %13, %12 : vector<64x128xf32>
    %15 = math.tanh %14 : vector<64x128xf32>
    %cst_12 = arith.constant 1.000000e+00 : f32
    %16 = vector.broadcast %cst_12 : f32 to vector<64x128xf32>
    %17 = arith.addf %15, %16 : vector<64x128xf32>
    %cst_13 = arith.constant 5.000000e-01 : f32
    %18 = vector.broadcast %cst_13 : f32 to vector<64x128xf32>
    %19 = arith.mulf %18, %17 : vector<64x128xf32>
    %c0_14 = arith.constant 0 : index
    %c0_15 = arith.constant 0 : index
    %20 = vector.load %arg6[%c0_14, %c0_15] : memref<64x128xf32, #tpu.memory_space<vmem>>, vector<64x128xf32>
    tpu.vector_store %arg6[%c0_14, %c0_15], %19 {strides = array<i32>} : memref<64x128xf32, #tpu.memory_space<vmem>>, vector<64x128xf32>,
    return
  }
  func.func @transform_0(%arg0: i32) -> (i32, i32) {
    %c0_i32 = arith.constant 0 : i32
    %c0_i32_0 = arith.constant 0 : i32
    return %arg0, %c0_i32 : i32, i32
  }
  func.func @transform_1(%arg0: i32) -> (i32, i32) {
    %c0_i32 = arith.constant 0 : i32
    %c0_i32_0 = arith.constant 0 : i32
    %c0_i32_1 = arith.constant 0 : i32
    return %c0_i32, %c0_i32_0 : i32, i32
  }
  func.func @transform_2(%arg0: i32) -> (i32, i32) {
    %c0_i32 = arith.constant 0 : i32
    %c0_i32_0 = arith.constant 0 : i32
    %c0_i32_1 = arith.constant 0 : i32
    return %c0_i32, %c0_i32_0 : i32, i32
  }
  func.func @transform_3(%arg0: i32) -> (i32, i32) {
    %c0_i32 = arith.constant 0 : i32
    %c0_i32_0 = arith.constant 0 : i32
    %c0_i32_1 = arith.constant 0 : i32
    return %c0_i32, %c0_i32_0 : i32, i32
  }
  func.func @transform_4(%arg0: i32) -> (i32, i32) {
    %c0_i32 = arith.constant 0 : i32
    %c0_i32_0 = arith.constant 0 : i32
    %c0_i32_1 = arith.constant 0 : i32
    return %c0_i32, %c0_i32_0 : i32, i32
  }
  func.func @transform_5(%arg0: i32) -> (i32, i32) {
    %c0_i32 = arith.constant 0 : i32
    %c0_i32_0 = arith.constant 0 : i32
    return %arg0, %c0_i32 : i32, i32
  }
}

</mosaic_0001>

<llo_original>
// kernel: tpu_custom_call.1
$region0: #{tpu_custom_call.1}
  #allocation0 [shape = 'u32[]', space=smem, size = 0x4, offset = 0x4, fixed_abs, tag = 'smem constant byte address 0x4 - core index']
  #allocation1 [shape = 'u32[144,128]{1,0:T(1,128)}', space=vmem, size = 0x12000, scoped, tag = 'internal scratch']
  %s0 = inlined_call_operand.hbm [shape: f32[200,128], index: 0, kind: input, shape index: {}]
  %s1 = inlined_call_operand.vmem [shape: f32[128,8], index: 1, kind: input, shape index: {}]
  %s2 = inlined_call_operand.vmem [shape: f32[1,8], index: 2, kind: input, shape index: {}]
  %s3 = inlined_call_operand.vmem [shape: f32[8,128], index: 3, kind: input, shape index: {}]
  %s4 = inlined_call_operand.vmem [shape: f32[1,128], index: 4, kind: input, shape index: {}]
  %s5 = inlined_call_operand.hbm [shape: f32[200,128], index: 5, kind: output, shape index: {}]
  %s6 = sld [smem:[#allocation0]]
  $region57: #{tpu_custom_call.1} parent=0
    _
  %s8 = ssub.s32 1, %s6
  %s9 = scalar_select 0, %s8, %s6
  $region1: #{tpu_custom_call.1} parent=0
    #allocation2 [shape = 'u8[65536]{0}', space=vmem, size = 0x10000, scoped, tag = 'input window, operand 0']
    #allocation3 [shape = 's32[2]{0}', space=sflag, size = 0x8, scoped, tag = 'scoped memory for tpu_custom_call.1']
    #allocation4 [shape = 's32[2]{0}', space=sflag, size = 0x8, scoped, tag = 'scoped memory for tpu_custom_call.1']
    #allocation5 [shape = 'u8[65536]{0}', space=vmem, size = 0x10000, scoped, tag = 'output window, operand 0']
    %10 = vsyncpa [#allocation3], 0
    %s11 = scalar_lea.sflag [#allocation3], 1
    %12 = vsyncpa %s11, 0
    %13 = vsyncpa [#allocation4], 0
    %s14 = scalar_lea.sflag [#allocation4], 1
    %15 = vsyncpa %s14, 0
    loop: start=0, step=1, limit=6
    $region2: #{tpu_custom_call.1} parent=1 // loop_pre_header
      _
    $region3: #{tpu_custom_call.1} parent=1 // loop_header
      %s17 = sphi 0, %s21
      %p18 = scmp.ge.s32.totalorder %s17, 6
      %s27 = sphi 0, %s29
      %s30 = sphi 0, %s27
      %s31 = sphi 0, %s30
      %s47 = sphi 0, %s31
      %s51 = sphi 0, %s51
      %s53 = sphi 0, %s51
      %s54 = sphi 0, %s53
      %s68 = sphi 0, %s54
      %s72 = sphi 0, %s72
      %s74 = sphi 0, %s72
      %s75 = sphi 0, %s74
      %s89 = sphi 0, %s75
      %s93 = sphi 0, %s93
      %s95 = sphi 0, %s93
      %s96 = sphi 0, %s95
      %s110 = sphi 0, %s96
      %s114 = sphi 0, %s114
      %s116 = sphi 0, %s114
      %s117 = sphi 0, %s116
      %s131 = sphi 0, %s117
      %s137 = sphi 0, %s139
      %s140 = sphi 0, %s137
      %s141 = sphi 0, %s140
      %s157 = sphi 0, %s141
    $region4: #{tpu_custom_call.1} parent=1 // loop_header_branch
      %20 = sbr.rel (%p18) target = $region8
    $region5: #{tpu_custom_call.1} parent=1 // loop_body
      %s22 = ssub.s32 %s17, 1
      %s23 = ssub.s32 %s17, 2
      %s24 = sadd.s32 %s17, 1
      %s25 = ssub.s32 %s17, %s24
      %p26 = scmp.eq.s32.totalorder %s25, 0
      %s28 = sadd.s32 %s27, 1
      %s29 = scalar_select %p26, %s27, %s28
      %p32 = pneg %p26
      %p33 = scmp.eq.s32.totalorder %s17, 3
      %p34 = por %p32, %p33
      %p35 = scmp.ne.s32.totalorder %s27, %s30
      %p36 = scmp.eq.s32.totalorder %s17, 0
      %p37 = por %p35, %p36
      %p38 = scmp.ne.s32.totalorder %s27, %s30
      %p39 = scmp.eq.s32.totalorder %s22, 3
      %p40 = por %p38, %p39
      %p41 = scmp.ne.s32.totalorder %s30, %s31
      %p42 = scmp.eq.s32.totalorder %s22, 0
      %p43 = por %p41, %p42
      %p44 = scmp.ne.s32.totalorder %s30, %s31
      %p45 = scmp.eq.s32.totalorder %s23, 3
      %p46 = por %p44, %p45
      %p48 = scmp.ne.s32.totalorder %s31, %s47
      %p49 = scmp.eq.s32.totalorder %s23, 0
      %p50 = por %p48, %p49
      %s52 = sadd.s32 %s51, 1
      %p55 = scmp.eq.s32.totalorder %s17, 3
      %p56 = scmp.ne.s32.totalorder %s51, %s53
      %p57 = scmp.eq.s32.totalorder %s17, 0
      %p58 = por %p56, %p57
      %p59 = scmp.ne.s32.totalorder %s51, %s53
      %p60 = scmp.eq.s32.totalorder %s22, 3
      %p61 = por %p59, %p60
      %p62 = scmp.ne.s32.totalorder %s53, %s54
      %p63 = scmp.eq.s32.totalorder %s22, 0
      %p64 = por %p62, %p63
      %p65 = scmp.ne.s32.totalorder %s53, %s54
      %p66 = scmp.eq.s32.totalorder %s23, 3
      %p67 = por %p65, %p66
      %p69 = scmp.ne.s32.totalorder %s54, %s68
      %p70 = scmp.eq.s32.totalorder %s23, 0
      %p71 = por %p69, %p70
      %s73 = sadd.s32 %s72, 1
      %p76 = scmp.eq.s32.totalorder %s17, 3
      %p77 = scmp.ne.s32.totalorder %s72, %s74
      %p78 = scmp.eq.s32.totalorder %s17, 0
      %p79 = por %p77, %p78
      %p80 = scmp.ne.s32.totalorder %s72, %s74
      %p81 = scmp.eq.s32.totalorder %s22, 3
      %p82 = por %p80, %p81
      %p83 = scmp.ne.s32.totalorder %s74, %s75
      %p84 = scmp.eq.s32.totalorder %s22, 0
      %p85 = por %p83, %p84
      %p86 = scmp.ne.s32.totalorder %s74, %s75
      %p87 = scmp.eq.s32.totalorder %s23, 3
      %p88 = por %p86, %p87
      %p90 = scmp.ne.s32.totalorder %s75, %s89
      %p91 = scmp.eq.s32.totalorder %s23, 0
      %p92 = por %p90, %p91
      %s94 = sadd.s32 %s93, 1
      %p97 = scmp.eq.s32.totalorder %s17, 3
      %p98 = scmp.ne.s32.totalorder %s93, %s95
      %p99 = scmp.eq.s32.totalorder %s17, 0
      %p100 = por %p98, %p99
      %p101 = scmp.ne.s32.totalorder %s93, %s95
      %p102 = scmp.eq.s32.totalorder %s22, 3
      %p103 = por %p101, %p102
      %p104 = scmp.ne.s32.totalorder %s95, %s96
      %p105 = scmp.eq.s32.totalorder %s22, 0
      %p106 = por %p104, %p105
      %p107 = scmp.ne.s32.totalorder %s95, %s96
      %p108 = scmp.eq.s32.totalorder %s23, 3
      %p109 = por %p107, %p108
      %p111 = scmp.ne.s32.totalorder %s96, %s110
      %p112 = scmp.eq.s32.totalorder %s23, 0
      %p113 = por %p111, %p112
      %s115 = sadd.s32 %s114, 1
      %p118 = scmp.eq.s32.totalorder %s17, 3
      %p119 = scmp.ne.s32.totalorder %s114, %s116
      %p120 = scmp.eq.s32.totalorder %s17, 0
      %p121 = por %p119, %p120
      %p122 = scmp.ne.s32.totalorder %s114, %s116
      %p123 = scmp.eq.s32.totalorder %s22, 3
      %p124 = por %p122, %p123
      %p125 = scmp.ne.s32.totalorder %s116, %s117
      %p126 = scmp.eq.s32.totalorder %s22, 0
      %p127 = por %p125, %p126
      %p128 = scmp.ne.s32.totalorder %s116, %s117
      %p129 = scmp.eq.s32.totalorder %s23, 3
      %p130 = por %p128, %p129
      %p132 = scmp.ne.s32.totalorder %s117, %s131
      %p133 = scmp.eq.s32.totalorder %s23, 0
      %p134 = por %p132, %p133
      %s135 = ssub.s32 %s17, %s24
      %p136 = scmp.eq.s32.totalorder %s135, 0
      %s138 = sadd.s32 %s137, 1
      %s139 = scalar_select %p136, %s137, %s138
      %p142 = pneg %p136
      %p143 = scmp.eq.s32.totalorder %s17, 3
      %p144 = por %p142, %p143
      %p145 = scmp.ne.s32.totalorder %s137, %s140
      %p146 = scmp.eq.s32.totalorder %s17, 0
      %p147 = por %p145, %p146
      %p148 = scmp.ne.s32.totalorder %s137, %s140
      %p149 = scmp.eq.s32.totalorder %s22, 3
      %p150 = por %p148, %p149
      %p151 = scmp.ne.s32.totalorder %s140, %s141
      %p152 = scmp.eq.s32.totalorder %s22, 0
      %p153 = por %p151, %p152
      %p154 = scmp.ne.s32.totalorder %s140, %s141
      %p155 = scmp.eq.s32.totalorder %s23, 3
      %p156 = por %p154, %p155
      %p158 = scmp.ne.s32.totalorder %s141, %s157
      %p159 = scmp.eq.s32.totalorder %s23, 0
      %p160 = por %p158, %p159
      %p161 = scmp.le.s32.totalorder 1, %s17
      %p162 = scmp.lt.s32.totalorder %s17, 5
      %p163 = pnand %p161, %p162
      %p164 = pneg %p163
      // Predicated region
      $region9: #{tpu_custom_call.1} parent=5 // pred_check
        _
      $region10: #{tpu_custom_call.1} parent=5 // pred_check_branch
        %166 = sbr.rel (%p163) target = $region12
      $region11: #{tpu_custom_call.1} parent=5 // pred_region
        %s167 = ssub.s32 %s17, 1
        // Predicated region
        $region13: #{tpu_custom_call.1} parent=11 // pred_check
          %p168 = pneg %p64
        $region14: #{tpu_custom_call.1} parent=11 // pred_check_branch
          %170 = sbr.rel (%p168) target = $region16
        $region15: #{tpu_custom_call.1} parent=11 // pred_region
          _
        $region16: #{tpu_custom_call.1} parent=11 // pred_fallthru
          _
        // Predicated region
        $region17: #{tpu_custom_call.1} parent=11 // pred_check
          %p171 = pneg %p85
        $region18: #{tpu_custom_call.1} parent=11 // pred_check_branch
          %173 = sbr.rel (%p171) target = $region20
        $region19: #{tpu_custom_call.1} parent=11 // pred_region
          _
        $region20: #{tpu_custom_call.1} parent=11 // pred_fallthru
          _
        // Predicated region
        $region21: #{tpu_custom_call.1} parent=11 // pred_check
          %p174 = pneg %p106
        $region22: #{tpu_custom_call.1} parent=11 // pred_check_branch
          %176 = sbr.rel (%p174) target = $region24
        $region23: #{tpu_custom_call.1} parent=11 // pred_region
          _
        $region24: #{tpu_custom_call.1} parent=11 // pred_fallthru
          _
        // Predicated region
        $region25: #{tpu_custom_call.1} parent=11 // pred_check
          %p177 = pneg %p127
        $region26: #{tpu_custom_call.1} parent=11 // pred_check_branch
          %179 = sbr.rel (%p177) target = $region28
        $region27: #{tpu_custom_call.1} parent=11 // pred_region
          _
        $region28: #{tpu_custom_call.1} parent=11 // pred_fallthru
          _
      $region12: #{tpu_custom_call.1} parent=5 // pred_fallthru
        _
      %p180 = scmp.lt.s32.totalorder %s17, 4
      // Predicated region
      $region29: #{tpu_custom_call.1} parent=5 // pred_check
        %p181 = pneg %p180
      $region30: #{tpu_custom_call.1} parent=5 // pred_check_branch
        %183 = sbr.rel (%p181) target = $region32
      $region31: #{tpu_custom_call.1} parent=5 // pred_region
        // Predicated region
        $region33: #{tpu_custom_call.1} parent=31 // pred_check
          %p184 = pneg %p37
        $region34: #{tpu_custom_call.1} parent=31 // pred_check_branch
          %186 = sbr.rel (%p184) target = $region36
        $region35: #{tpu_custom_call.1} parent=31 // pred_region
          %s187 = sand.u32 %s27, 1
          %s188 = scalar_lea.sflag [#allocation3], %s187
          %s189 = sand.u32 %s27, 1
          %s190 = smul.addr %s189, 64
          %s191 = scalar_lea.vmem [#allocation2], %s190
          %s192 = smul.u32 8, %s17
          %s193 = ssub.s32 25, %s192
          %p194 = scmp.lt.s32.totalorder %s193, 8
          %s195 = scalar_select %p194, %s193, 8
          %s196 = smul.u32 128, %s195
          %s198 = ssub.s32 1024, %s196
          %199 = vsyncadd %s188, %s198
          %p200 = scmp.ne.s32.totalorder 0, %s196
          %s201 = smul.addr %s192, 128
          %s202 = scalar_lea.hbm %s0, %s201
          %s203 = smul.u32 8, %s195
          %s204 = sshll.u32 %s191, 4
          %s205 = int_to_ptr.vmem [resolvable:$true] %s204
          %s206 = sshll.u32 %s203, 4
          %210 = dma.hbm_to_vmem [thread:$0]  (%p200), %s202, %s206, %s205, %s188, 128, 128, 8
        $region36: #{tpu_custom_call.1} parent=31 // pred_fallthru
          _
      $region32: #{tpu_custom_call.1} parent=5 // pred_fallthru
        _
      %p211 = scmp.le.s32.totalorder 1, %s17
      %p212 = scmp.lt.s32.totalorder %s17, 5
      %p213 = pnand %p211, %p212
      %p214 = pneg %p213
      // Predicated region
      $region37: #{tpu_custom_call.1} parent=5 // pred_check
        _
      $region38: #{tpu_custom_call.1} parent=5 // pred_check_branch
        %216 = sbr.rel (%p213) target = $region40
      $region39: #{tpu_custom_call.1} parent=5 // pred_region
        %s217 = ssub.s32 %s17, 1
        %s218 = sand.u32 %s30, 1
        %s219 = scalar_lea.sflag [#allocation3], %s218
        %s220 = sand.u32 %s30, 1
        %s221 = smul.addr %s220, 64
        %s222 = scalar_lea.vmem [#allocation2], %s221
        // Predicated region
        $region41: #{tpu_custom_call.1} parent=39 // pred_check
          %p223 = pneg %p43
        $region42: #{tpu_custom_call.1} parent=39 // pred_check_branch
          %225 = sbr.rel (%p223) target = $region44
        $region43: #{tpu_custom_call.1} parent=39 // pred_region
          %226 = dma.done %s219, 1024
        $region44: #{tpu_custom_call.1} parent=39 // pred_fallthru
          _
        %s227 = sand.u32 %s30, 1
        %s228 = scalar_lea.sflag [#allocation3], %s227
        %s229 = sand.u32 %s30, 1
        %s230 = smul.addr %s229, 64
        %s231 = scalar_lea.vmem [#allocation2], %s230
        %p232 = pneg %p43
        %p233 = pneg %p40
        %p234 = pneg %p64
        %p235 = pneg %p61
        %p236 = pneg %p85
        %p237 = pneg %p82
        %p238 = pneg %p106
        %p239 = pneg %p103
        %p240 = pneg %p127
        %p241 = pneg %p124
        %p242 = pneg %p153
        %p243 = pneg %p150
        %s244 = sand.u32 %s140, 1
        %s245 = scalar_lea.sflag [#allocation4], %s244
        %s246 = sand.u32 %s140, 1
        %s247 = smul.addr %s246, 64
        %s248 = scalar_lea.vmem [#allocation5], %s247
        %s249 = smul.u32 8, %s22
        %s250 = ssub.s32 25, %s249
        %p251 = scmp.lt.s32.totalorder %s250, 8
        %s252 = scalar_select %p251, %s250, 8
        %s253 = smul.u32 128, %s252
        %s254 = smul.u32 8, %s22
        %s255 = ssub.s32 25, %s254
        %p256 = scmp.lt.s32.totalorder %s255, 8
        %s257 = scalar_select %p256, %s255, 8
        %s258 = smul.u32 128, %s257
        %v259 = vld [vmem:[%s222] sm:$0xff]
        %v260 = vld [vmem:[%s222 + $0x8] sm:$0xff]
        %v261 = vld [vmem:[%s222 + $0x10] sm:$0xff]
        %v262 = vld [vmem:[%s222 + $0x18] sm:$0xff]
        %v263 = vld [vmem:[%s222 + $0x20] sm:$0xff]
        %v264 = vld [vmem:[%s222 + $0x28] sm:$0xff]
        %v265 = vld [vmem:[%s222 + $0x30] sm:$0xff]
        %v266 = vld [vmem:[%s222 + $0x38] sm:$0xff]
        %v267 = vld [vmem:[%s1] sm:$0xff]
        %v268 = vld [vmem:[%s1 + $0x8] sm:$0xff]
        %v269 = vld [vmem:[%s1 + $0x10] sm:$0xff]
        %v270 = vld [vmem:[%s1 + $0x18] sm:$0xff]
        %v271 = vld [vmem:[%s1 + $0x20] sm:$0xff]
        %v272 = vld [vmem:[%s1 + $0x28] sm:$0xff]
        %v273 = vld [vmem:[%s1 + $0x30] sm:$0xff]
        %v274 = vld [vmem:[%s1 + $0x38] sm:$0xff]
        %v275 = vld [vmem:[%s1 + $0x40] sm:$0xff]
        %v276 = vld [vmem:[%s1 + $0x48] sm:$0xff]
        %v277 = vld [vmem:[%s1 + $0x50] sm:$0xff]
        %v278 = vld [vmem:[%s1 + $0x58] sm:$0xff]
        %v279 = vld [vmem:[%s1 + $0x60] sm:$0xff]
        %v280 = vld [vmem:[%s1 + $0x68] sm:$0xff]
        %v281 = vld [vmem:[%s1 + $0x70] sm:$0xff]
        %v282 = vld [vmem:[%s1 + $0x78] sm:$0xff]
        %v283 = vld [vmem:[%s2] sm:$0x1]
        %v285 = vlaneseq
        %v286 = vshrl.u32 %v285, 7
        %v287 = vsub.s32 0, %v286
        %v288 = vrot.slane %v283, %v287
        %290 = vmatprep.subr.mxu0 0.0
        %291 = vmatpush1.msra.mxu0 %v267
        %292 = vmatprep.subr.mxu0 0.0
        %293 = vmatpush1.msra.mxu0 %v268
        %294 = vmatprep.subr.mxu0 0.0
        %295 = vmatpush1.msra.mxu0 %v269
        %296 = vmatprep.subr.mxu0 0.0
        %297 = vmatpush1.msra.mxu0 %v270
        %298 = vmatprep.subr.mxu0 0.0
        %299 = vmatpush1.msra.mxu0 %v271
        %300 = vmatprep.subr.mxu0 0.0
        %301 = vmatpush1.msra.mxu0 %v272
        %302 = vmatprep.subr.mxu0 0.0
        %303 = vmatpush1.msra.mxu0 %v273
        %304 = vmatprep.subr.mxu0 0.0
        %305 = vmatpush1.msra.mxu0 %v274
        %306 = vmatprep.subr.mxu0 0.0
        %307 = vmatpush1.msra.mxu0 %v275
        %308 = vmatprep.subr.mxu0 0.0
        %309 = vmatpush1.msra.mxu0 %v276
        %310 = vmatprep.subr.mxu0 0.0
        %311 = vmatpush1.msra.mxu0 %v277
        %312 = vmatprep.subr.mxu0 0.0
        %313 = vmatpush1.msra.mxu0 %v278
        %314 = vmatprep.subr.mxu0 0.0
        %315 = vmatpush1.msra.mxu0 %v279
        %316 = vmatprep.subr.mxu0 0.0
        %317 = vmatpush1.msra.mxu0 %v280
        %318 = vmatprep.subr.mxu0 0.0
        %319 = vmatpush1.msra.mxu0 %v281
        %320 = vmatprep.subr.mxu0 0.0
        %321 = vmatpush1.msra.mxu0 %v282
        %322 = vmatprep.subr.mxu0 0.0
        %323 = vmatpush1.msra.mxu0 0.0
        %324 = vmatprep.subr.mxu0 0.0
        %325 = vmatpush1.msra.mxu0 0.0
        %326 = vmatprep.subr.mxu0 0.0
        %327 = vmatpush1.msra.mxu0 0.0
        %328 = vmatprep.subr.mxu0 0.0
        %329 = vmatpush1.msra.mxu0 0.0
        %330 = vmatprep.subr.mxu0 0.0
        %331 = vmatpush1.msra.mxu0 0.0
        %332 = vmatprep.subr.mxu0 0.0
        %333 = vmatpush1.msra.mxu0 0.0
        %334 = vmatprep.subr.mxu0 0.0
        %335 = vmatpush1.msra.mxu0 0.0
        %336 = vmatprep.subr.mxu0 0.0
        %337 = vmatpush1.msra.mxu0 0.0
        %338 = vmatprep.subr.mxu0 0.0
        %339 = vmatpush1.msra.mxu0 0.0
        %340 = vmatprep.subr.mxu0 0.0
        %341 = vmatpush1.msra.mxu0 0.0
        %342 = vmatprep.subr.mxu0 0.0
        %343 = vmatpush1.msra.mxu0 0.0
        %344 = vmatprep.subr.mxu0 0.0
        %345 = vmatpush1.msra.mxu0 0.0
        %346 = vmatprep.subr.mxu0 0.0
        %347 = vmatpush1.msra.mxu0 0.0
        %348 = vmatprep.subr.mxu0 0.0
        %349 = vmatpush1.msra.mxu0 0.0
        %350 = vmatprep.subr.mxu0 0.0
        %351 = vmatpush1.msra.mxu0 0.0
        %352 = vmatprep.subr.mxu0 0.0
        %353 = vmatpush1.msra.mxu0 0.0
        %354 = vmatprep.mubr.f32.mxu0 0.0
        %355 = vmatmul.mubr.f32.gmra.mrb[0].mxu0 %v259
        %v356 = vpop.f32.mrb[0].mxu0
        %v357 = vadd.f32 %v288, %v356
        %v358 = vpop.f32.mrb[0].mxu0
        %359 = vmatprep.mubr.f32.mxu0 0.0
        %360 = vmatmul.mubr.f32.gmra.mrb[0].mxu0 %v260
        %v361 = vpop.f32.mrb[0].mxu0
        %v362 = vadd.f32 %v288, %v361
        %v363 = vpop.f32.mrb[0].mxu0
        %364 = vmatprep.mubr.f32.mxu0 0.0
        %365 = vmatmul.mubr.f32.gmra.mrb[0].mxu0 %v261
        %v366 = vpop.f32.mrb[0].mxu0
        %v367 = vadd.f32 %v288, %v366
        %v368 = vpop.f32.mrb[0].mxu0
        %369 = vmatprep.mubr.f32.mxu0 0.0
        %370 = vmatmul.mubr.f32.gmra.mrb[0].mxu0 %v262
        %v371 = vpop.f32.mrb[0].mxu0
        %v372 = vadd.f32 %v288, %v371
        %v373 = vpop.f32.mrb[0].mxu0
        %374 = vmatprep.mubr.f32.mxu0 0.0
        %375 = vmatmul.mubr.f32.gmra.mrb[0].mxu0 %v263
        %v376 = vpop.f32.mrb[0].mxu0
        %v377 = vadd.f32 %v288, %v376
        %v378 = vpop.f32.mrb[0].mxu0
        %379 = vmatprep.mubr.f32.mxu0 0.0
        %380 = vmatmul.mubr.f32.gmra.mrb[0].mxu0 %v264
        %v381 = vpop.f32.mrb[0].mxu0
        %v382 = vadd.f32 %v288, %v381
        %v383 = vpop.f32.mrb[0].mxu0
        %384 = vmatprep.mubr.f32.mxu0 0.0
        %385 = vmatmul.mubr.f32.gmra.mrb[0].mxu0 %v265
        %v386 = vpop.f32.mrb[0].mxu0
        %v387 = vadd.f32 %v288, %v386
        %v388 = vpop.f32.mrb[0].mxu0
        %389 = vmatprep.mubr.f32.mxu0 0.0
        %390 = vmatmul.mubr.f32.gmra.mrb[0].mxu0 %v266
        %v391 = vpop.f32.mrb[0].mxu0
        %v392 = vadd.f32 %v288, %v391
        %v393 = vpop.f32.mrb[0].mxu0
        %394 = vdwg.mxu0
        %v395 = vmax.f32 %v357, 0.0
        %v396 = vmax.f32 %v362, 0.0
        %v397 = vmax.f32 %v367, 0.0
        %v398 = vmax.f32 %v372, 0.0
        %v399 = vmax.f32 %v377, 0.0
        %v400 = vmax.f32 %v382, 0.0
        %v401 = vmax.f32 %v387, 0.0
        %v402 = vmax.f32 %v392, 0.0
        %v403 = vld [vmem:[%s3] sm:$0xff]
        %v404 = vld [vmem:[%s4] sm:$0x1]
        %v406 = vlaneseq
        %v407 = vshrl.u32 %v406, 7
        %v408 = vsub.s32 0, %v407
        %v409 = vrot.slane %v404, %v408
        %vm411 = vcmask 64512
        %v413 = vsel %vm411, %v395, 0
        %v416 = vsel %vm411, %v396, 0
        %v419 = vsel %vm411, %v397, 0
        %v422 = vsel %vm411, %v398, 0
        %v425 = vsel %vm411, %v399, 0
        %v428 = vsel %vm411, %v400, 0
        %v431 = vsel %vm411, %v401, 0
        %v434 = vsel %vm411, %v402, 0
        %436 = vmatprep.subr.mxu0 0.0
        %437 = vmatpush1.msra.mxu0 %v403
        %438 = vmatprep.subr.mxu0 0.0
        %439 = vmatpush1.msra.mxu0 0.0
        %440 = vmatprep.subr.mxu0 0.0
        %441 = vmatpush1.msra.mxu0 0.0
        %442 = vmatprep.subr.mxu0 0.0
        %443 = vmatpush1.msra.mxu0 0.0
        %444 = vmatprep.subr.mxu0 0.0
        %445 = vmatpush1.msra.mxu0 0.0
        %446 = vmatprep.subr.mxu0 0.0
        %447 = vmatpush1.msra.mxu0 0.0
        %448 = vmatprep.subr.mxu0 0.0
        %449 = vmatpush1.msra.mxu0 0.0
        %450 = vmatprep.subr.mxu0 0.0
        %451 = vmatpush1.msra.mxu0 0.0
        %452 = vmatprep.subr.mxu0 0.0
        %453 = vmatpush1.msra.mxu0 0.0
        %454 = vmatprep.subr.mxu0 0.0
        %455 = vmatpush1.msra.mxu0 0.0
        %456 = vmatprep.subr.mxu0 0.0
        %457 = vmatpush1.msra.mxu0 0.0
        %458 = vmatprep.subr.mxu0 0.0
        %459 = vmatpush1.msra.mxu0 0.0
        %460 = vmatprep.subr.mxu0 0.0
        %461 = vmatpush1.msra.mxu0 0.0
        %462 = vmatprep.subr.mxu0 0.0
        %463 = vmatpush1.msra.mxu0 0.0
        %464 = vmatprep.subr.mxu0 0.0
        %465 = vmatpush1.msra.mxu0 0.0
        %466 = vmatprep.subr.mxu0 0.0
        %467 = vmatpush1.msra.mxu0 0.0
        %468 = vmatprep.subr.mxu0 0.0
        %469 = vmatpush1.msra.mxu0 0.0
        %470 = vmatprep.subr.mxu0 0.0
        %471 = vmatpush1.msra.mxu0 0.0
        %472 = vmatprep.subr.mxu0 0.0
        %473 = vmatpush1.msra.mxu0 0.0
        %474 = vmatprep.subr.mxu0 0.0
        %475 = vmatpush1.msra.mxu0 0.0
        %476 = vmatprep.subr.mxu0 0.0
        %477 = vmatpush1.msra.mxu0 0.0
        %478 = vmatprep.subr.mxu0 0.0
        %479 = vmatpush1.msra.mxu0 0.0
        %480 = vmatprep.subr.mxu0 0.0
        %481 = vmatpush1.msra.mxu0 0.0
        %482 = vmatprep.subr.mxu0 0.0
        %483 = vmatpush1.msra.mxu0 0.0
        %484 = vmatprep.subr.mxu0 0.0
        %485 = vmatpush1.msra.mxu0 0.0
        %486 = vmatprep.subr.mxu0 0.0
        %487 = vmatpush1.msra.mxu0 0.0
        %488 = vmatprep.subr.mxu0 0.0
        %489 = vmatpush1.msra.mxu0 0.0
        %490 = vmatprep.subr.mxu0 0.0
        %491 = vmatpush1.msra.mxu0 0.0
        %492 = vmatprep.subr.mxu0 0.0
        %493 = vmatpush1.msra.mxu0 0.0
        %494 = vmatprep.subr.mxu0 0.0
        %495 = vmatpush1.msra.mxu0 0.0
        %496 = vmatprep.subr.mxu0 0.0
        %497 = vmatpush1.msra.mxu0 0.0
        %498 = vmatprep.subr.mxu0 0.0
        %499 = vmatpush1.msra.mxu0 0.0
        %500 = vmatprep.mubr.f32.mxu0 0.0
        %501 = vmatmul.mubr.f32.gmra.mrb[0].mxu0 %v413
        %v502 = vpop.f32.mrb[0].mxu0
        %v503 = vadd.f32 %v409, %v502
        %v504 = vpop.f32.mrb[0].mxu0
        %505 = vmatprep.mubr.f32.mxu0 0.0
        %506 = vmatmul.mubr.f32.gmra.mrb[0].mxu0 %v416
        %v507 = vpop.f32.mrb[0].mxu0
        %v508 = vadd.f32 %v409, %v507
        %v509 = vpop.f32.mrb[0].mxu0
        %510 = vmatprep.mubr.f32.mxu0 0.0
        %511 = vmatmul.mubr.f32.gmra.mrb[0].mxu0 %v419
        %v512 = vpop.f32.mrb[0].mxu0
        %v513 = vadd.f32 %v409, %v512
        %v514 = vpop.f32.mrb[0].mxu0
        %515 = vmatprep.mubr.f32.mxu0 0.0
        %516 = vmatmul.mubr.f32.gmra.mrb[0].mxu0 %v422
        %v517 = vpop.f32.mrb[0].mxu0
        %v518 = vadd.f32 %v409, %v517
        %v519 = vpop.f32.mrb[0].mxu0
        %520 = vmatprep.mubr.f32.mxu0 0.0
        %521 = vmatmul.mubr.f32.gmra.mrb[0].mxu0 %v425
        %v522 = vpop.f32.mrb[0].mxu0
        %v523 = vadd.f32 %v409, %v522
        %v524 = vpop.f32.mrb[0].mxu0
        %525 = vmatprep.mubr.f32.mxu0 0.0
        %526 = vmatmul.mubr.f32.gmra.mrb[0].mxu0 %v428
        %v527 = vpop.f32.mrb[0].mxu0
        %v528 = vadd.f32 %v409, %v527
        %v529 = vpop.f32.mrb[0].mxu0
        %530 = vmatprep.mubr.f32.mxu0 0.0
        %531 = vmatmul.mubr.f32.gmra.mrb[0].mxu0 %v431
        %v532 = vpop.f32.mrb[0].mxu0
        %v533 = vadd.f32 %v409, %v532
        %v534 = vpop.f32.mrb[0].mxu0
        %535 = vmatprep.mubr.f32.mxu0 0.0
        %536 = vmatmul.mubr.f32.gmra.mrb[0].mxu0 %v434
        %v537 = vpop.f32.mrb[0].mxu0
        %v538 = vadd.f32 %v409, %v537
        %v539 = vpop.f32.mrb[0].mxu0
        %540 = vdwg.mxu0
        %v541 = vmul.f32 %v503, 0.5
        %v542 = vmul.f32 %v508, 0.5
        %v543 = vmul.f32 %v513, 0.5
        %v544 = vmul.f32 %v518, 0.5
        %v545 = vmul.f32 %v523, 0.5
        %v546 = vmul.f32 %v528, 0.5
        %v547 = vmul.f32 %v533, 0.5
        %v548 = vmul.f32 %v538, 0.5
        %v549 = vtanh.pop %v541
        %v550 = vtanh.pop %v542
        %v551 = vtanh.pop %v543
        %v552 = vtanh.pop %v544
        %v553 = vtanh.pop %v545
        %v554 = vtanh.pop %v546
        %v555 = vtanh.pop %v547
        %v556 = vtanh.pop %v548
        %v557 = vadd.f32 %v549, 1.0
        %v558 = vadd.f32 %v550, 1.0
        %v559 = vadd.f32 %v551, 1.0
        %v560 = vadd.f32 %v552, 1.0
        %v561 = vadd.f32 %v553, 1.0
        %v562 = vadd.f32 %v554, 1.0
        %v563 = vadd.f32 %v555, 1.0
        %v564 = vadd.f32 %v556, 1.0
        %v565 = vmul.f32 %v557, 0.5
        %v566 = vmul.f32 %v558, 0.5
        %v567 = vmul.f32 %v559, 0.5
        %v568 = vmul.f32 %v560, 0.5
        %v569 = vmul.f32 %v561, 0.5
        %v570 = vmul.f32 %v562, 0.5
        %v571 = vmul.f32 %v563, 0.5
        %v572 = vmul.f32 %v564, 0.5
        %573 = vst [vmem:[%s248] sm:$0xff] %v565
        %574 = vst [vmem:[%s248 + $0x8] sm:$0xff] %v566
        %575 = vst [vmem:[%s248 + $0x10] sm:$0xff] %v567
        %576 = vst [vmem:[%s248 + $0x18] sm:$0xff] %v568
        %577 = vst [vmem:[%s248 + $0x20] sm:$0xff] %v569
        %578 = vst [vmem:[%s248 + $0x28] sm:$0xff] %v570
        %579 = vst [vmem:[%s248 + $0x30] sm:$0xff] %v571
        %580 = vst [vmem:[%s248 + $0x38] sm:$0xff] %v572
        %s581 = sand.u32 %s140, 1
        %s582 = scalar_lea.sflag [#allocation4], %s581
        %s583 = sand.u32 %s140, 1
        %s584 = smul.addr %s583, 64
        %s585 = scalar_lea.vmem [#allocation5], %s584
        // Predicated region
        $region45: #{tpu_custom_call.1} parent=39 // pred_check
          %p586 = pneg %p150
        $region46: #{tpu_custom_call.1} parent=39 // pred_check_branch
          %588 = sbr.rel (%p586) target = $region48
        $region47: #{tpu_custom_call.1} parent=39 // pred_region
          %s589 = smul.u32 8, %s22
          %s590 = ssub.s32 25, %s589
          %p591 = scmp.lt.s32.totalorder %s590, 8
          %s592 = scalar_select %p591, %s590, 8
          %s593 = smul.u32 128, %s592
          %s595 = ssub.s32 1024, %s593
          %596 = vsyncadd %s582, %s595
          %p597 = scmp.ne.s32.totalorder 0, %s593
          %s598 = smul.addr %s589, 128
          %s599 = scalar_lea.hbm %s5, %s598
          %s600 = smul.u32 8, %s592
          %s601 = sshll.u32 %s585, 4
          %s602 = int_to_ptr.vmem [resolvable:$true] %s601
          %s603 = sshll.u32 %s600, 4
          %607 = dma.vmem_to_hbm [thread:$0]  (%p597), %s602, %s603, %s599, %s582, 128, 128, 8
        $region48: #{tpu_custom_call.1} parent=39 // pred_fallthru
          _
      $region40: #{tpu_custom_call.1} parent=5 // pred_fallthru
        _
      %p608 = scmp.le.s32.totalorder 2, %s17
      // Predicated region
      $region49: #{tpu_custom_call.1} parent=5 // pred_check
        %p609 = pneg %p608
      $region50: #{tpu_custom_call.1} parent=5 // pred_check_branch
        %611 = sbr.rel (%p609) target = $region52
      $region51: #{tpu_custom_call.1} parent=5 // pred_region
        %s612 = ssub.s32 %s17, 2
        // Predicated region
        $region53: #{tpu_custom_call.1} parent=51 // pred_check
          %p613 = pneg %p156
        $region54: #{tpu_custom_call.1} parent=51 // pred_check_branch
          %615 = sbr.rel (%p613) target = $region56
        $region55: #{tpu_custom_call.1} parent=51 // pred_region
          %s616 = sand.u32 %s141, 1
          %s617 = scalar_lea.sflag [#allocation4], %s616
          %s618 = sand.u32 %s141, 1
          %s619 = smul.addr %s618, 64
          %s620 = scalar_lea.vmem [#allocation5], %s619
          %621 = dma.done %s617, 1024
        $region56: #{tpu_custom_call.1} parent=51 // pred_fallthru
          _
      $region52: #{tpu_custom_call.1} parent=5 // pred_fallthru
        _
    $region6: #{tpu_custom_call.1} parent=1 // loop_footer
      %s21 = sadd.s32 1, %s17
    $region7: #{tpu_custom_call.1} parent=1 // loop_footer_branch
      %16 = sbr.rel target = $region3
    $region8: #{tpu_custom_call.1} parent=1 // loop_exit
      _
    %622 = vsyncpa [#allocation3], 1
    %s623 = scalar_lea.sflag [#allocation3], 1
    %624 = vsyncpa %s623, 1
    %625 = vsyncpa [#allocation4], 1
    %s626 = scalar_lea.sflag [#allocation4], 1
    %627 = vsyncpa %s626, 1

</llo_original>
